<compile_context>
chip_gen: v7x
topology: tpu7x:2x2x1
jax: 0.10.0
libtpu: 0.0.40
codegen_flags: <defaults>
</compile_context>

<pallas_src>
import functools

import jax
import jax.numpy as jnp
from jax import lax
from jax.experimental import pallas as pl
from jax.experimental.pallas import tpu as pltpu


B_TILE = 512  # lane-dense batch tile (batch lives in the lane dimension)


def recommender_kernel(uids_ref, mids_ref, ratings_ref, user_tblT_ref, movie_tblT_ref,
                       w_user_ref, w_movie_ref, bias_ref, out_ref, sqerr_ref, *, n_valid):
    i = pl.program_id(0)
    b_tile = uids_ref.shape[1]
    n_users = user_tblT_ref.shape[1]
    n_movies = movie_tblT_ref.shape[1]

    uids = uids_ref[...]   # (1, B_TILE) int32 user ids in [0, n_users)
    mids = mids_ref[...]   # (1, B_TILE) int32 movie ids in [0, n_movies)

    # Embedding gather as two half-size one-hot MXU matmuls (one compare each; no concat and
    # no zero-padded block-diagonal table).  Out-of-range ids silently yield a zero embedding
    # (torch nn.Embedding would raise).
    urow = lax.broadcasted_iota(jnp.int32, (n_users, b_tile), 0)
    mrow = lax.broadcasted_iota(jnp.int32, (n_movies, b_tile), 0)
    hot_u = (urow == uids).astype(user_tblT_ref.dtype)        # (n_users,  B_TILE)
    hot_m = (mrow == mids).astype(movie_tblT_ref.dtype)       # (n_movies, B_TILE)

    u_featsT = jnp.dot(user_tblT_ref[...], hot_u,
                       preferred_element_type=jnp.float32)    # (32, B_TILE)
    m_featsT = jnp.dot(movie_tblT_ref[...], hot_m,
                       preferred_element_type=jnp.float32)    # (32, B_TILE)

    # nn.Linear(64, 1): split the weight into user/movie halves -> VPU multiply + sublane
    # reduce; the concat of [user_emb, movie_emb] is fused away.  Epilogue stays f32 (v5e VPU).
    logits = (jnp.sum(u_featsT * w_user_ref[...], axis=0, keepdims=True)
              + jnp.sum(m_featsT * w_movie_ref[...], axis=0, keepdims=True)
              + bias_ref[0, 0])
    out_ref[...] = logits                                      # (1, B_TILE) lane-dense

    # Per-lane masked squared error (padding lanes past the real batch write 0); reduced to
    # MSE/RMSE in the wrapper so this grid axis has no carried state and stays "parallel".
    lane = lax.broadcasted_iota(jnp.int32, (1, b_tile), 1)
    valid = (i * b_tile + lane) < n_valid
    diff = jnp.where(valid, logits - ratings_ref[...], 0.0)
    sqerr_ref[...] = diff * diff                               # (1, B_TILE) lane-dense


def _vmem_budget_bytes(n_users, n_movies, emb, b_tile):
    """Footprint-derived VMEM limit, capped for v7x's 64 MiB per-core VMEM."""
    f32 = 4
    tables = (n_users + n_movies) * emb * f32          # single-buffered residents
    weights = 2 * emb * f32
    tiles = 5 * b_tile * f32 * 2                        # uids/mids/ratings/preds/sqerr, double-buffered
    hots = (n_users + n_movies) * b_tile * f32          # one-hot intermediates
    feats = 2 * emb * b_tile * f32
    need = tables + weights + tiles + hots + feats
    budget = 2 * need + (4 << 20)                       # 2x slack + 4 MiB headroom
    return max(16 << 20, min(budget, 48 << 20))


def recommender_forward(users, movies, ratings, user_table, movie_table, w, b):
    """users, movies: (B,) int; ratings: (B,) float; tables (n,32); w (1,64); b (1,)."""
    B = users.shape[0]
    n_users, emb = user_table.shape
    n_movies = movie_table.shape[0]

    num_tiles = pl.cdiv(B, B_TILE)
    B_pad = num_tiles * B_TILE
    pad = B_pad - B

    # Lane-major (1, B_pad) operands.
    uids = jnp.pad(users.astype(jnp.int32), (0, pad)).reshape(1, B_pad)
    mids = jnp.pad(movies.astype(jnp.int32), (0, pad)).reshape(1, B_pad)
    ratings2d = jnp.pad(ratings.astype(jnp.float32), (0, pad)).reshape(1, B_pad)

    # Feature-major (32, n) table layouts keep feats^T / logits lane-dense in batch.
    # (No zero-padded block-diagonal concat is built anymore.)
    user_tblT = user_table.astype(jnp.float32).T            # (32, n_users)
    movie_tblT = movie_table.astype(jnp.float32).T          # (32, n_movies)

    w_flat = w.astype(jnp.float32).reshape(2 * emb)         # torch Linear weight (1, 64)
    w_user = w_flat[:emb].reshape(emb, 1)
    w_movie = w_flat[emb:].reshape(emb, 1)
    bias = b.astype(jnp.float32).reshape(1, 1)

    kernel = functools.partial(recommender_kernel, n_valid=B)

    # Constant index_map -> single-buffer the resident operands (halves their VMEM on v7x).
    resident = pl.Buffered(1)

    grid_spec = pltpu.PrefetchScalarGridSpec(
        num_scalar_prefetch=0,
        grid=(num_tiles,),
        in_specs=[
            pl.BlockSpec((1, B_TILE), lambda i: (0, i)),                              # user ids
            pl.BlockSpec((1, B_TILE), lambda i: (0, i)),                              # movie ids
            pl.BlockSpec((1, B_TILE), lambda i: (0, i)),                              # ratings
            pl.BlockSpec((emb, n_users), lambda i: (0, 0), pipeline_mode=resident),   # user table^T
            pl.BlockSpec((emb, n_movies), lambda i: (0, 0), pipeline_mode=resident),  # movie table^T
            pl.BlockSpec((emb, 1), lambda i: (0, 0), pipeline_mode=resident),         # w user half
            pl.BlockSpec((emb, 1), lambda i: (0, 0), pipeline_mode=resident),         # w movie half
            pl.BlockSpec(memory_space=pltpu.MemorySpace.SMEM),                        # bias scalar
        ],
        out_specs=(
            pl.BlockSpec((1, B_TILE), lambda i: (0, i)),   # predictions (lane-dense)
            pl.BlockSpec((1, B_TILE), lambda i: (0, i)),   # per-lane masked squared error
        ),
    )

    preds_pad, sqerr_pad = pl.pallas_call(
        kernel,
        grid_spec=grid_spec,
        out_shape=(
            jax.ShapeDtypeStruct((1, B_pad), jnp.float32),
            jax.ShapeDtypeStruct((1, B_pad), jnp.float32),
        ),
        compiler_params=pltpu.CompilerParams(
            # No carried accumulator -> batch tiles are independent; both v7x TCs can take them.
            dimension_semantics=("parallel",),
            vmem_limit_bytes=_vmem_budget_bytes(n_users, n_movies, emb, B_TILE),
        ),
    )(uids, mids, ratings2d, user_tblT, movie_tblT, w_user, w_movie, bias)

    output = preds_pad[0, :B].reshape(B, 1)
    mse = jnp.sum(sqerr_pad) / float(B)          # padded lanes were zeroed in-kernel
    metrics = {"rmse": jnp.sqrt(mse)}
    return output, mse, metrics


if __name__ == "__main__":
    n_users, n_movies, embed_dim, batch = 16, 24, 32, 8

    key = jax.random.PRNGKey(0)
    k_ut, k_mt, k_w, k_b, k_u, k_m, k_r = jax.random.split(key, 7)

    # Deterministic synthetic parameters (nn.Embedding ~ N(0,1); Linear ~ small uniform).
    user_table = jax.random.normal(k_ut, (n_users, embed_dim), dtype=jnp.float32)
    movie_table = jax.random.normal(k_mt, (n_movies, embed_dim), dtype=jnp.float32)
    bound = 1.0 / jnp.sqrt(64.0)
    w = jax.random.uniform(k_w, (1, 2 * embed_dim), minval=-bound, maxval=bound,
                           dtype=jnp.float32)
    b = jax.random.uniform(k_b, (1,), minval=-bound, maxval=bound, dtype=jnp.float32)

    users = jax.random.randint(k_u, (batch,), 0, n_users, dtype=jnp.int32)
    movies = jax.random.randint(k_m, (batch,), 0, n_movies, dtype=jnp.int32)
    ratings = jax.random.uniform(k_r, (batch,), minval=0.5, maxval=5.0, dtype=jnp.float32)

    output, loss, metrics = recommender_forward(
        users, movies, ratings, user_table, movie_table, w, b)
    jax.block_until_ready((output, loss, metrics["rmse"]))

    # Pure-JAX reference check.
    feats_ref = jnp.concatenate([user_table[users], movie_table[movies]], axis=1)
    out_ref = feats_ref @ w.T + b
    mse_ref = jnp.mean((out_ref - ratings.reshape(-1, 1)) ** 2)
    assert jnp.allclose(output, out_ref, atol=1e-5)
    assert jnp.allclose(loss, mse_ref, atol=1e-5)
    assert jnp.allclose(metrics["rmse"], jnp.sqrt(mse_ref), atol=1e-5)

    print("KERNEL_OK")
</pallas_src>

<mosaic_0001>
module attributes {stable_mosaic.version = 11 : i64} {
  func.func @recommender_kernel(%arg0: i32, %arg1: memref<1x512xi32, #tpu.memory_space<vmem>>, %arg2: memref<1x512xi32, #tpu.memory_space<vmem>>, %arg3: memref<1x512xf32, #tpu.memory_space<vmem>>, %arg4: memref<32x16xf32, #tpu.memory_space<vmem>>, %arg5: memref<32x24xf32, #tpu.memory_space<vmem>>, %arg6: memref<32x1xf32, #tpu.memory_space<vmem>>, %arg7: memref<32x1xf32, #tpu.memory_space<vmem>>, %arg8: memref<1x1xf32, #tpu.memory_space<smem>>, %arg9: memref<1x512xf32, #tpu.memory_space<vmem>>, %arg10: memref<1x512xf32, #tpu.memory_space<vmem>>) attributes {dimension_semantics = [#tpu.dimension_semantics<parallel>], iteration_bounds = array<i64: 1>, scalar_prefetch = 0 : i64, scratch_operands = 0 : i64, tpu.core_type = #tpu.core_type<tc>, window_params = [{transform_indices = @transform_0, window_bounds = array<i64: 1, 512>}, {transform_indices = @transform_1, window_bounds = array<i64: 1, 512>}, {transform_indices = @transform_2, window_bounds = array<i64: 1, 512>}, {pipeline_mode = #tpu.pipeline_mode<synchronous>, transform_indices = @transform_3, window_bounds = array<i64: 32, 16>}, {pipeline_mode = #tpu.pipeline_mode<synchronous>, transform_indices = @transform_4, window_bounds = array<i64: 32, 24>}, {pipeline_mode = #tpu.pipeline_mode<synchronous>, transform_indices = @transform_5, window_bounds = array<i64: 32, 1>}, {pipeline_mode = #tpu.pipeline_mode<synchronous>, transform_indices = @transform_6, window_bounds = array<i64: 32, 1>}, {transform_indices = @transform_7, window_bounds = array<i64: 1, 1>}, {transform_indices = @transform_8, window_bounds = array<i64: 1, 512>}, {transform_indices = @transform_9, window_bounds = array<i64: 1, 512>}]} {
    %c0 = arith.constant 0 : index
    %c0_0 = arith.constant 0 : index
    %0 = vector.load %arg1[%c0, %c0_0] : memref<1x512xi32, #tpu.memory_space<vmem>>, vector<1x512xi32>
    %c0_1 = arith.constant 0 : index
    %c0_2 = arith.constant 0 : index
    %1 = vector.load %arg2[%c0_1, %c0_2] : memref<1x512xi32, #tpu.memory_space<vmem>>, vector<1x512xi32>
    %2 = tpu.iota {dimensions = array<i32: 0>} : vector<16x512xi32>
    %3 = tpu.iota {dimensions = array<i32: 0>} : vector<24x512xi32>
    %4 = vector.broadcast %0 : vector<1x512xi32> to vector<16x512xi32>
    %5 = arith.cmpi eq, %2, %4 : vector<16x512xi32>
    %6 = arith.extui %5 : vector<16x512xi1> to vector<16x512xi32>
    %7 = arith.sitofp %6 : vector<16x512xi32> to vector<16x512xf32>
    %8 = vector.broadcast %1 : vector<1x512xi32> to vector<24x512xi32>
    %9 = arith.cmpi eq, %3, %8 : vector<24x512xi32>
    %10 = arith.extui %9 : vector<24x512xi1> to vector<24x512xi32>
    %11 = arith.sitofp %10 : vector<24x512xi32> to vector<24x512xf32>
    %c0_3 = arith.constant 0 : index
    %c0_4 = arith.constant 0 : index
    %12 = vector.load %arg4[%c0_3, %c0_4] : memref<32x16xf32, #tpu.memory_space<vmem>>, vector<32x16xf32>
    %cst = arith.constant dense<0.000000e+00> : vector<32x512xf32>
    %13 = tpu.matmul %12, %7, %cst {dimension_numbers = #tpu.dot_dimension_numbers<[1], [0], [0], [1], [0, 0, 1, 1], [], []>} : vector<32x16xf32>, vector<16x512xf32>, vector<32x512xf32> -> vector<32x512xf32>
    %c0_5 = arith.constant 0 : index
    %c0_6 = arith.constant 0 : index
    %14 = vector.load %arg5[%c0_5, %c0_6] : memref<32x24xf32, #tpu.memory_space<vmem>>, vector<32x24xf32>
    %cst_7 = arith.constant dense<0.000000e+00> : vector<32x512xf32>
    %15 = tpu.matmul %14, %11, %cst_7 {dimension_numbers = #tpu.dot_dimension_numbers<[1], [0], [0], [1], [0, 0, 1, 1], [], []>} : vector<32x24xf32>, vector<24x512xf32>, vector<32x512xf32> -> vector<32x512xf32>
    %c0_8 = arith.constant 0 : index
    %c0_9 = arith.constant 0 : index
    %16 = vector.load %arg6[%c0_8, %c0_9] : memref<32x1xf32, #tpu.memory_space<vmem>>, vector<32x1xf32>
    %17 = vector.broadcast %16 : vector<32x1xf32> to vector<32x512xf32>
    %18 = arith.mulf %13, %17 : vector<32x512xf32>
    %cst_10 = arith.constant dense<0.000000e+00> : vector<512xf32>
    %19 = vector.multi_reduction <add>, %18, %cst_10 [0] : vector<32x512xf32> to vector<512xf32>
    %20 = vector.shape_cast %19 : vector<512xf32> to vector<1x512xf32>
    %c0_11 = arith.constant 0 : index
    %c0_12 = arith.constant 0 : index
    %21 = vector.load %arg7[%c0_11, %c0_12] : memref<32x1xf32, #tpu.memory_space<vmem>>, vector<32x1xf32>
    %22 = vector.broadcast %21 : vector<32x1xf32> to vector<32x512xf32>
    %23 = arith.mulf %15, %22 : vector<32x512xf32>
    %cst_13 = arith.constant dense<0.000000e+00> : vector<512xf32>
    %24 = vector.multi_reduction <add>, %23, %cst_13 [0] : vector<32x512xf32> to vector<512xf32>
    %25 = vector.shape_cast %24 : vector<512xf32> to vector<1x512xf32>
    %26 = arith.addf %20, %25 : vector<1x512xf32>
    %c0_14 = arith.constant 0 : index
    %c0_15 = arith.constant 0 : index
    %27 = memref.load %arg8[%c0_14, %c0_15] : memref<1x1xf32, #tpu.memory_space<smem>>
    %28 = vector.broadcast %27 : f32 to vector<1x512xf32>
    %29 = arith.addf %26, %28 : vector<1x512xf32>
    %c0_16 = arith.constant 0 : index
    %c0_17 = arith.constant 0 : index
    %30 = vector.load %arg9[%c0_16, %c0_17] : memref<1x512xf32, #tpu.memory_space<vmem>>, vector<1x512xf32>
    tpu.vector_store %arg9[%c0_16, %c0_17], %29 {strides = array<i32>} : memref<1x512xf32, #tpu.memory_space<vmem>>, vector<1x512xf32>,
    %31 = tpu.iota {dimensions = array<i32: 1>} : vector<1x512xi32>
    %c512_i32 = arith.constant 512 : i32
    %32 = arith.muli %arg0, %c512_i32 : i32
    %33 = vector.broadcast %32 : i32 to vector<1x512xi32>
    %34 = arith.addi %33, %31 : vector<1x512xi32>
    %c8_i32 = arith.constant 8 : i32
    %35 = vector.broadcast %c8_i32 : i32 to vector<1x512xi32>
    %36 = arith.cmpi slt, %34, %35 : vector<1x512xi32>
    %c0_18 = arith.constant 0 : index
    %c0_19 = arith.constant 0 : index
    %37 = vector.load %arg3[%c0_18, %c0_19] : memref<1x512xf32, #tpu.memory_space<vmem>>, vector<1x512xf32>
    %38 = arith.subf %29, %37 : vector<1x512xf32>
    %cst_20 = arith.constant 0.000000e+00 : f32
    %39 = vector.broadcast %cst_20 : f32 to vector<1x512xf32>
    %40 = arith.select %36, %38, %39 : vector<1x512xi1>, vector<1x512xf32>
    %41 = arith.mulf %40, %40 : vector<1x512xf32>
    %c0_21 = arith.constant 0 : index
    %c0_22 = arith.constant 0 : index
    %42 = vector.load %arg10[%c0_21, %c0_22] : memref<1x512xf32, #tpu.memory_space<vmem>>, vector<1x512xf32>
    tpu.vector_store %arg10[%c0_21, %c0_22], %41 {strides = array<i32>} : memref<1x512xf32, #tpu.memory_space<vmem>>, vector<1x512xf32>,
    return
  }
  func.func @transform_0(%arg0: i32) -> (i32, i32) {
    %c0_i32 = arith.constant 0 : i32
    %c0_i32_0 = arith.constant 0 : i32
    return %c0_i32, %arg0 : i32, i32
  }
  func.func @transform_1(%arg0: i32) -> (i32, i32) {
    %c0_i32 = arith.constant 0 : i32
    %c0_i32_0 = arith.constant 0 : i32
    return %c0_i32, %arg0 : i32, i32
  }
  func.func @transform_2(%arg0: i32) -> (i32, i32) {
    %c0_i32 = arith.constant 0 : i32
    %c0_i32_0 = arith.constant 0 : i32
    return %c0_i32, %arg0 : i32, i32
  }
  func.func @transform_3(%arg0: i32) -> (i32, i32) {
    %c0_i32 = arith.constant 0 : i32
    %c0_i32_0 = arith.constant 0 : i32
    %c0_i32_1 = arith.constant 0 : i32
    return %c0_i32, %c0_i32_0 : i32, i32
  }
  func.func @transform_4(%arg0: i32) -> (i32, i32) {
    %c0_i32 = arith.constant 0 : i32
    %c0_i32_0 = arith.constant 0 : i32
    %c0_i32_1 = arith.constant 0 : i32
    return %c0_i32, %c0_i32_0 : i32, i32
  }
  func.func @transform_5(%arg0: i32) -> (i32, i32) {
    %c0_i32 = arith.constant 0 : i32
    %c0_i32_0 = arith.constant 0 : i32
    %c0_i32_1 = arith.constant 0 : i32
    return %c0_i32, %c0_i32_0 : i32, i32
  }
  func.func @transform_6(%arg0: i32) -> (i32, i32) {
    %c0_i32 = arith.constant 0 : i32
    %c0_i32_0 = arith.constant 0 : i32
    %c0_i32_1 = arith.constant 0 : i32
    return %c0_i32, %c0_i32_0 : i32, i32
  }
  func.func @transform_7(%arg0: i32) -> (i32, i32) {
    %c0_i32 = arith.constant 0 : i32
    %c0_i32_0 = arith.constant 0 : i32
    %c0_i32_1 = arith.constant 0 : i32
    return %c0_i32, %c0_i32_0 : i32, i32
  }
  func.func @transform_8(%arg0: i32) -> (i32, i32) {
    %c0_i32 = arith.constant 0 : i32
    %c0_i32_0 = arith.constant 0 : i32
    return %c0_i32, %arg0 : i32, i32
  }
  func.func @transform_9(%arg0: i32) -> (i32, i32) {
    %c0_i32 = arith.constant 0 : i32
    %c0_i32_0 = arith.constant 0 : i32
    return %c0_i32, %arg0 : i32, i32
  }
}

</mosaic_0001>

<llo_original>
// kernel: tpu_custom_call.1
$region0: #{tpu_custom_call.1}
  #allocation0 [shape = 'u32[]', space=smem, size = 0x4, offset = 0x4, fixed_abs, tag = 'smem constant byte address 0x4 - core index']
  #allocation1 [shape = 'u32[144,128]{1,0:T(1,128)}', space=vmem, size = 0x12000, scoped, tag = 'internal scratch']
  #allocation2 [shape = 'f32[1,1]{1,0:T(1,128)S(6)}', space=smem, size = 0x200, scoped, tag = 'scoped memory for tpu_custom_call.1']
  %s0 = inlined_call_operand.vmem [shape: s32[1,512], index: 0, kind: input, shape index: {}]
  %s1 = inlined_call_operand.vmem [shape: s32[1,512], index: 1, kind: input, shape index: {}]
  %s2 = inlined_call_operand.vmem [shape: f32[1,512], index: 2, kind: input, shape index: {}]
  %s3 = inlined_call_operand.vmem [shape: f32[32,16], index: 3, kind: input, shape index: {}]
  %s4 = inlined_call_operand.vmem [shape: f32[32,24], index: 4, kind: input, shape index: {}]
  %s5 = inlined_call_operand.vmem [shape: f32[32,1], index: 5, kind: input, shape index: {}]
  %s6 = inlined_call_operand.vmem [shape: f32[32,1], index: 6, kind: input, shape index: {}]
  %s7 = inlined_call_operand.<no memory space> [shape: f32[1,1], index: 7, kind: input, shape index: {}]
  %s8 = inlined_call_operand.hbm [shape: f32[1,512], index: 8, kind: output, shape index: {0}]
  %s9 = inlined_call_operand.hbm [shape: f32[1,512], index: 9, kind: output, shape index: {1}]
  %10 = xla_tuple %s8, %s9
  %s11 = sld [smem:[#allocation0]]
  $region50: #{tpu_custom_call.1} parent=0
    _
  %s13 = ssub.s32 1, %s11
  %s14 = scalar_select 0, %s13, %s11
  %15 = sst [smem:[#allocation2]] %s7
  $region1: #{tpu_custom_call.1} parent=0
    #allocation3 [shape = 'u8[2048]{0}', space=vmem, size = 0x800, scoped, tag = 'output window, operand 0, single buffered']
    #allocation4 [shape = 's32[1]{0}', space=sflag, size = 0x4, scoped, tag = 'scoped memory for tpu_custom_call.1']
    #allocation5 [shape = 'u8[2048]{0}', space=vmem, size = 0x800, scoped, tag = 'output window, operand 1, single buffered']
    #allocation6 [shape = 's32[1]{0}', space=sflag, size = 0x4, scoped, tag = 'scoped memory for tpu_custom_call.1']
    %16 = vsyncpa [#allocation4], 0
    %17 = vsyncpa [#allocation6], 0
    // Predicated region
    $region2: #{tpu_custom_call.1} parent=1 // pred_check
      _
    $region3: #{tpu_custom_call.1} parent=1 // pred_check_branch
      %19 = sbr.rel (0) target = $region5
    $region4: #{tpu_custom_call.1} parent=1 // pred_region
      _
    $region5: #{tpu_custom_call.1} parent=1 // pred_fallthru
      _
    // Predicated region
    $region6: #{tpu_custom_call.1} parent=1 // pred_check
      _
    $region7: #{tpu_custom_call.1} parent=1 // pred_check_branch
      %21 = sbr.rel (0) target = $region9
    $region8: #{tpu_custom_call.1} parent=1 // pred_region
      _
    $region9: #{tpu_custom_call.1} parent=1 // pred_fallthru
      _
    // Predicated region
    $region10: #{tpu_custom_call.1} parent=1 // pred_check
      _
    $region11: #{tpu_custom_call.1} parent=1 // pred_check_branch
      %23 = sbr.rel (0) target = $region13
    $region12: #{tpu_custom_call.1} parent=1 // pred_region
      _
    $region13: #{tpu_custom_call.1} parent=1 // pred_fallthru
      _
    // Predicated region
    $region14: #{tpu_custom_call.1} parent=1 // pred_check
      _
    $region15: #{tpu_custom_call.1} parent=1 // pred_check_branch
      %25 = sbr.rel (0) target = $region17
    $region16: #{tpu_custom_call.1} parent=1 // pred_region
      _
    $region17: #{tpu_custom_call.1} parent=1 // pred_fallthru
      _
    // Predicated region
    $region18: #{tpu_custom_call.1} parent=1 // pred_check
      _
    $region19: #{tpu_custom_call.1} parent=1 // pred_check_branch
      %27 = sbr.rel (0) target = $region21
    $region20: #{tpu_custom_call.1} parent=1 // pred_region
      _
    $region21: #{tpu_custom_call.1} parent=1 // pred_fallthru
      _
    // Predicated region
    $region22: #{tpu_custom_call.1} parent=1 // pred_check
      _
    $region23: #{tpu_custom_call.1} parent=1 // pred_check_branch
      %29 = sbr.rel (0) target = $region25
    $region24: #{tpu_custom_call.1} parent=1 // pred_region
      _
    $region25: #{tpu_custom_call.1} parent=1 // pred_fallthru
      _
    // Predicated region
    $region26: #{tpu_custom_call.1} parent=1 // pred_check
      _
    $region27: #{tpu_custom_call.1} parent=1 // pred_check_branch
      %31 = sbr.rel (0) target = $region29
    $region28: #{tpu_custom_call.1} parent=1 // pred_region
      _
    $region29: #{tpu_custom_call.1} parent=1 // pred_fallthru
      _
    // Predicated region
    $region30: #{tpu_custom_call.1} parent=1 // pred_check
      _
    $region31: #{tpu_custom_call.1} parent=1 // pred_check_branch
      %33 = sbr.rel (0) target = $region33
    $region32: #{tpu_custom_call.1} parent=1 // pred_region
      _
    $region33: #{tpu_custom_call.1} parent=1 // pred_fallthru
      _
    %v34 = vld [vmem:[%s0] sm:$0xf]
    %v35 = vld [vmem:[%s1] sm:$0xf]
    %v36 = vlaneseq
    %v37 = vshrl.u32 %v36, 7
    %v38 = vadd.s32 %v37, 8
    %v39 = vadd.s32 %v37, 16
    %v40 = vlaneseq
    %v41 = vshrl.u32 %v40, 7
    %v42 = vsub.s32 0, %v41
    %v43 = vrot.slane %v34, %v42
    %v44 = vlaneseq
    %v45 = vshrl.u32 %v44, 7
    %v46 = vsub.s32 1, %v45
    %v47 = vrot.slane %v34, %v46
    %v48 = vlaneseq
    %v49 = vshrl.u32 %v48, 7
    %v50 = vsub.s32 2, %v49
    %v51 = vrot.slane %v34, %v50
    %v52 = vlaneseq
    %v53 = vshrl.u32 %v52, 7
    %v54 = vsub.s32 3, %v53
    %v55 = vrot.slane %v34, %v54
    %vm56 = vcmp.eq.s32.totalorder %v37, %v43
    %vm57 = vcmp.eq.s32.totalorder %v37, %v47
    %vm58 = vcmp.eq.s32.totalorder %v37, %v51
    %vm59 = vcmp.eq.s32.totalorder %v37, %v55
    %vm60 = vcmp.eq.s32.totalorder %v38, %v43
    %vm61 = vcmp.eq.s32.totalorder %v38, %v47
    %vm62 = vcmp.eq.s32.totalorder %v38, %v51
    %vm63 = vcmp.eq.s32.totalorder %v38, %v55
    %v64 = vsel %vm56, 1, 0
    %v65 = vsel %vm57, 1, 0
    %v66 = vsel %vm58, 1, 0
    %v67 = vsel %vm59, 1, 0
    %v68 = vsel %vm60, 1, 0
    %v69 = vsel %vm61, 1, 0
    %v70 = vsel %vm62, 1, 0
    %v71 = vsel %vm63, 1, 0
    %v72 = vcvt.s32.f32 %v64
    %v73 = vcvt.s32.f32 %v65
    %v74 = vcvt.s32.f32 %v66
    %v75 = vcvt.s32.f32 %v67
    %v76 = vcvt.s32.f32 %v68
    %v77 = vcvt.s32.f32 %v69
    %v78 = vcvt.s32.f32 %v70
    %v79 = vcvt.s32.f32 %v71
    %v80 = vlaneseq
    %v81 = vshrl.u32 %v80, 7
    %v82 = vsub.s32 0, %v81
    %v83 = vrot.slane %v35, %v82
    %v84 = vlaneseq
    %v85 = vshrl.u32 %v84, 7
    %v86 = vsub.s32 1, %v85
    %v87 = vrot.slane %v35, %v86
    %v88 = vlaneseq
    %v89 = vshrl.u32 %v88, 7
    %v90 = vsub.s32 2, %v89
    %v91 = vrot.slane %v35, %v90
    %v92 = vlaneseq
    %v93 = vshrl.u32 %v92, 7
    %v94 = vsub.s32 3, %v93
    %v95 = vrot.slane %v35, %v94
    %vm96 = vcmp.eq.s32.totalorder %v37, %v83
    %vm97 = vcmp.eq.s32.totalorder %v37, %v87
    %vm98 = vcmp.eq.s32.totalorder %v37, %v91
    %vm99 = vcmp.eq.s32.totalorder %v37, %v95
    %vm100 = vcmp.eq.s32.totalorder %v38, %v83
    %vm101 = vcmp.eq.s32.totalorder %v38, %v87
    %vm102 = vcmp.eq.s32.totalorder %v38, %v91
    %vm103 = vcmp.eq.s32.totalorder %v38, %v95
    %vm104 = vcmp.eq.s32.totalorder %v39, %v83
    %vm105 = vcmp.eq.s32.totalorder %v39, %v87
    %vm106 = vcmp.eq.s32.totalorder %v39, %v91
    %vm107 = vcmp.eq.s32.totalorder %v39, %v95
    %v108 = vsel %vm96, 1, 0
    %v109 = vsel %vm97, 1, 0
    %v110 = vsel %vm98, 1, 0
    %v111 = vsel %vm99, 1, 0
    %v112 = vsel %vm100, 1, 0
    %v113 = vsel %vm101, 1, 0
    %v114 = vsel %vm102, 1, 0
    %v115 = vsel %vm103, 1, 0
    %v116 = vsel %vm104, 1, 0
    %v117 = vsel %vm105, 1, 0
    %v118 = vsel %vm106, 1, 0
    %v119 = vsel %vm107, 1, 0
    %v120 = vcvt.s32.f32 %v108
    %v121 = vcvt.s32.f32 %v109
    %v122 = vcvt.s32.f32 %v110
    %v123 = vcvt.s32.f32 %v111
    %v124 = vcvt.s32.f32 %v112
    %v125 = vcvt.s32.f32 %v113
    %v126 = vcvt.s32.f32 %v114
    %v127 = vcvt.s32.f32 %v115
    %v128 = vcvt.s32.f32 %v116
    %v129 = vcvt.s32.f32 %v117
    %v130 = vcvt.s32.f32 %v118
    %v131 = vcvt.s32.f32 %v119
    %v132 = vld [vmem:[%s3] sm:$0xff]
    %v133 = vld [vmem:[%s3 + $0x8] sm:$0xff]
    %v134 = vld [vmem:[%s3 + $0x10] sm:$0xff]
    %v135 = vld [vmem:[%s3 + $0x18] sm:$0xff]
    %vm136 = vcmask 130048
    %v138 = vsel %vm136, %v132, 0
    %v141 = vsel %vm136, %v133, 0
    %v144 = vsel %vm136, %v134, 0
    %v147 = vsel %vm136, %v135, 0
    %149 = vmatprep.subr.mxu0 %v73
    %150 = vmatpush1.msra.mxu0 %v72
    %151 = vmatprep.subr.mxu0 %v77
    %152 = vmatpush1.msra.mxu0 %v76
    %153 = vmatprep.subr.mxu0 0.0
    %154 = vmatpush1.msra.mxu0 0.0
    %155 = vmatprep.subr.mxu0 0.0
    %156 = vmatpush1.msra.mxu0 0.0
    %157 = vmatprep.subr.mxu0 0.0
    %158 = vmatpush1.msra.mxu0 0.0
    %159 = vmatprep.subr.mxu0 0.0
    %160 = vmatpush1.msra.mxu0 0.0
    %161 = vmatprep.subr.mxu0 0.0
    %162 = vmatpush1.msra.mxu0 0.0
    %163 = vmatprep.subr.mxu0 0.0
    %164 = vmatpush1.msra.mxu0 0.0
    %165 = vmatprep.subr.mxu0 0.0
    %166 = vmatpush1.msra.mxu0 0.0
    %167 = vmatprep.subr.mxu0 0.0
    %168 = vmatpush1.msra.mxu0 0.0
    %169 = vmatprep.subr.mxu0 0.0
    %170 = vmatpush1.msra.mxu0 0.0
    %171 = vmatprep.subr.mxu0 0.0
    %172 = vmatpush1.msra.mxu0 0.0
    %173 = vmatprep.subr.mxu0 0.0
    %174 = vmatpush1.msra.mxu0 0.0
    %175 = vmatprep.subr.mxu0 0.0
    %176 = vmatpush1.msra.mxu0 0.0
    %177 = vmatprep.subr.mxu0 0.0
    %178 = vmatpush1.msra.mxu0 0.0
    %179 = vmatprep.subr.mxu0 0.0
    %180 = vmatpush1.msra.mxu0 0.0
    %181 = vmatprep.subr.mxu0 0.0
    %182 = vmatpush1.msra.mxu0 0.0
    %183 = vmatprep.subr.mxu0 0.0
    %184 = vmatpush1.msra.mxu0 0.0
    %185 = vmatprep.subr.mxu0 0.0
    %186 = vmatpush1.msra.mxu0 0.0
    %187 = vmatprep.subr.mxu0 0.0
    %188 = vmatpush1.msra.mxu0 0.0
    %189 = vmatprep.subr.mxu0 0.0
    %190 = vmatpush1.msra.mxu0 0.0
    %191 = vmatprep.subr.mxu0 0.0
    %192 = vmatpush1.msra.mxu0 0.0
    %193 = vmatprep.subr.mxu0 0.0
    %194 = vmatpush1.msra.mxu0 0.0
    %195 = vmatprep.subr.mxu0 0.0
    %196 = vmatpush1.msra.mxu0 0.0
    %197 = vmatprep.subr.mxu0 0.0
    %198 = vmatpush1.msra.mxu0 0.0
    %199 = vmatprep.subr.mxu0 0.0
    %200 = vmatpush1.msra.mxu0 0.0
    %201 = vmatprep.subr.mxu0 0.0
    %202 = vmatpush1.msra.mxu0 0.0
    %203 = vmatprep.subr.mxu0 0.0
    %204 = vmatpush1.msra.mxu0 0.0
    %205 = vmatprep.subr.mxu0 0.0
    %206 = vmatpush1.msra.mxu0 0.0
    %207 = vmatprep.subr.mxu0 0.0
    %208 = vmatpush1.msra.mxu0 0.0
    %209 = vmatprep.subr.mxu0 0.0
    %210 = vmatpush1.msra.mxu0 0.0
    %211 = vmatprep.subr.mxu0 0.0
    %212 = vmatpush1.msra.mxu0 0.0
    %213 = vmatprep.mubr.f32.mxu0 0.0
    %214 = vmatmul.mubr.f32.gmra.mrb[0].mxu0 %v138
    %v215 = vpop.f32.mrb[0].mxu0
    %v216 = vadd.f32 0.0, %v215
    %v217 = vpop.f32.mrb[0].mxu0
    %v218 = vadd.f32 0.0, %v217
    %219 = vmatprep.mubr.f32.mxu0 0.0
    %220 = vmatmul.mubr.f32.gmra.mrb[0].mxu0 %v141
    %v221 = vpop.f32.mrb[0].mxu0
    %v222 = vadd.f32 0.0, %v221
    %v223 = vpop.f32.mrb[0].mxu0
    %v224 = vadd.f32 0.0, %v223
    %225 = vmatprep.mubr.f32.mxu0 0.0
    %226 = vmatmul.mubr.f32.gmra.mrb[0].mxu0 %v144
    %v227 = vpop.f32.mrb[0].mxu0
    %v228 = vadd.f32 0.0, %v227
    %v229 = vpop.f32.mrb[0].mxu0
    %v230 = vadd.f32 0.0, %v229
    %231 = vmatprep.mubr.f32.mxu0 0.0
    %232 = vmatmul.mubr.f32.gmra.mrb[0].mxu0 %v147
    %v233 = vpop.f32.mrb[0].mxu0
    %v234 = vadd.f32 0.0, %v233
    %v235 = vpop.f32.mrb[0].mxu0
    %v236 = vadd.f32 0.0, %v235
    %237 = vdwg.mxu0
    %238 = vmatprep.subr.mxu0 %v75
    %239 = vmatpush1.msra.mxu0 %v74
    %240 = vmatprep.subr.mxu0 %v79
    %241 = vmatpush1.msra.mxu0 %v78
    %242 = vmatprep.subr.mxu0 0.0
    %243 = vmatpush1.msra.mxu0 0.0
    %244 = vmatprep.subr.mxu0 0.0
    %245 = vmatpush1.msra.mxu0 0.0
    %246 = vmatprep.subr.mxu0 0.0
    %247 = vmatpush1.msra.mxu0 0.0
    %248 = vmatprep.subr.mxu0 0.0
    %249 = vmatpush1.msra.mxu0 0.0
    %250 = vmatprep.subr.mxu0 0.0
    %251 = vmatpush1.msra.mxu0 0.0
    %252 = vmatprep.subr.mxu0 0.0
    %253 = vmatpush1.msra.mxu0 0.0
    %254 = vmatprep.subr.mxu0 0.0
    %255 = vmatpush1.msra.mxu0 0.0
    %256 = vmatprep.subr.mxu0 0.0
    %257 = vmatpush1.msra.mxu0 0.0
    %258 = vmatprep.subr.mxu0 0.0
    %259 = vmatpush1.msra.mxu0 0.0
    %260 = vmatprep.subr.mxu0 0.0
    %261 = vmatpush1.msra.mxu0 0.0
    %262 = vmatprep.subr.mxu0 0.0
    %263 = vmatpush1.msra.mxu0 0.0
    %264 = vmatprep.subr.mxu0 0.0
    %265 = vmatpush1.msra.mxu0 0.0
    %266 = vmatprep.subr.mxu0 0.0
    %267 = vmatpush1.msra.mxu0 0.0
    %268 = vmatprep.subr.mxu0 0.0
    %269 = vmatpush1.msra.mxu0 0.0
    %270 = vmatprep.subr.mxu0 0.0
    %271 = vmatpush1.msra.mxu0 0.0
    %272 = vmatprep.subr.mxu0 0.0
    %273 = vmatpush1.msra.mxu0 0.0
    %274 = vmatprep.subr.mxu0 0.0
    %275 = vmatpush1.msra.mxu0 0.0
    %276 = vmatprep.subr.mxu0 0.0
    %277 = vmatpush1.msra.mxu0 0.0
    %278 = vmatprep.subr.mxu0 0.0
    %279 = vmatpush1.msra.mxu0 0.0
    %280 = vmatprep.subr.mxu0 0.0
    %281 = vmatpush1.msra.mxu0 0.0
    %282 = vmatprep.subr.mxu0 0.0
    %283 = vmatpush1.msra.mxu0 0.0
    %284 = vmatprep.subr.mxu0 0.0
    %285 = vmatpush1.msra.mxu0 0.0
    %286 = vmatprep.subr.mxu0 0.0
    %287 = vmatpush1.msra.mxu0 0.0
    %288 = vmatprep.subr.mxu0 0.0
    %289 = vmatpush1.msra.mxu0 0.0
    %290 = vmatprep.subr.mxu0 0.0
    %291 = vmatpush1.msra.mxu0 0.0
    %292 = vmatprep.subr.mxu0 0.0
    %293 = vmatpush1.msra.mxu0 0.0
    %294 = vmatprep.subr.mxu0 0.0
    %295 = vmatpush1.msra.mxu0 0.0
    %296 = vmatprep.subr.mxu0 0.0
    %297 = vmatpush1.msra.mxu0 0.0
    %298 = vmatprep.subr.mxu0 0.0
    %299 = vmatpush1.msra.mxu0 0.0
    %300 = vmatprep.subr.mxu0 0.0
    %301 = vmatpush1.msra.mxu0 0.0
    %302 = vmatprep.mubr.f32.mxu0 0.0
    %303 = vmatmul.mubr.f32.gmra.mrb[0].mxu0 %v138
    %v304 = vpop.f32.mrb[0].mxu0
    %v305 = vadd.f32 0.0, %v304
    %v306 = vpop.f32.mrb[0].mxu0
    %v307 = vadd.f32 0.0, %v306
    %308 = vmatprep.mubr.f32.mxu0 0.0
    %309 = vmatmul.mubr.f32.gmra.mrb[0].mxu0 %v141
    %v310 = vpop.f32.mrb[0].mxu0
    %v311 = vadd.f32 0.0, %v310
    %v312 = vpop.f32.mrb[0].mxu0
    %v313 = vadd.f32 0.0, %v312
    %314 = vmatprep.mubr.f32.mxu0 0.0
    %315 = vmatmul.mubr.f32.gmra.mrb[0].mxu0 %v144
    %v316 = vpop.f32.mrb[0].mxu0
    %v317 = vadd.f32 0.0, %v316
    %v318 = vpop.f32.mrb[0].mxu0
    %v319 = vadd.f32 0.0, %v318
    %320 = vmatprep.mubr.f32.mxu0 0.0
    %321 = vmatmul.mubr.f32.gmra.mrb[0].mxu0 %v147
    %v322 = vpop.f32.mrb[0].mxu0
    %v323 = vadd.f32 0.0, %v322
    %v324 = vpop.f32.mrb[0].mxu0
    %v325 = vadd.f32 0.0, %v324
    %326 = vdwg.mxu0
    %v327 = vld [vmem:[%s4] sm:$0xff]
    %v328 = vld [vmem:[%s4 + $0x8] sm:$0xff]
    %v329 = vld [vmem:[%s4 + $0x10] sm:$0xff]
    %v330 = vld [vmem:[%s4 + $0x18] sm:$0xff]
    %vm331 = vcmask 195584
    %v333 = vsel %vm331, %v327, 0
    %v336 = vsel %vm331, %v328, 0
    %v339 = vsel %vm331, %v329, 0
    %v342 = vsel %vm331, %v330, 0
    %344 = vmatprep.subr.mxu0 %v121
    %345 = vmatpush1.msra.mxu0 %v120
    %346 = vmatprep.subr.mxu0 %v125
    %347 = vmatpush1.msra.mxu0 %v124
    %348 = vmatprep.subr.mxu0 %v129
    %349 = vmatpush1.msra.mxu0 %v128
    %350 = vmatprep.subr.mxu0 0.0
    %351 = vmatpush1.msra.mxu0 0.0
    %352 = vmatprep.subr.mxu0 0.0
    %353 = vmatpush1.msra.mxu0 0.0
    %354 = vmatprep.subr.mxu0 0.0
    %355 = vmatpush1.msra.mxu0 0.0
    %356 = vmatprep.subr.mxu0 0.0
    %357 = vmatpush1.msra.mxu0 0.0
    %358 = vmatprep.subr.mxu0 0.0
    %359 = vmatpush1.msra.mxu0 0.0
    %360 = vmatprep.subr.mxu0 0.0
    %361 = vmatpush1.msra.mxu0 0.0
    %362 = vmatprep.subr.mxu0 0.0
    %363 = vmatpush1.msra.mxu0 0.0
    %364 = vmatprep.subr.mxu0 0.0
    %365 = vmatpush1.msra.mxu0 0.0
    %366 = vmatprep.subr.mxu0 0.0
    %367 = vmatpush1.msra.mxu0 0.0
    %368 = vmatprep.subr.mxu0 0.0
    %369 = vmatpush1.msra.mxu0 0.0
    %370 = vmatprep.subr.mxu0 0.0
    %371 = vmatpush1.msra.mxu0 0.0
    %372 = vmatprep.subr.mxu0 0.0
    %373 = vmatpush1.msra.mxu0 0.0
    %374 = vmatprep.subr.mxu0 0.0
    %375 = vmatpush1.msra.mxu0 0.0
    %376 = vmatprep.subr.mxu0 0.0
    %377 = vmatpush1.msra.mxu0 0.0
    %378 = vmatprep.subr.mxu0 0.0
    %379 = vmatpush1.msra.mxu0 0.0
    %380 = vmatprep.subr.mxu0 0.0
    %381 = vmatpush1.msra.mxu0 0.0
    %382 = vmatprep.subr.mxu0 0.0
    %383 = vmatpush1.msra.mxu0 0.0
    %384 = vmatprep.subr.mxu0 0.0
    %385 = vmatpush1.msra.mxu0 0.0
    %386 = vmatprep.subr.mxu0 0.0
    %387 = vmatpush1.msra.mxu0 0.0
    %388 = vmatprep.subr.mxu0 0.0
    %389 = vmatpush1.msra.mxu0 0.0
    %390 = vmatprep.subr.mxu0 0.0
    %391 = vmatpush1.msra.mxu0 0.0
    %392 = vmatprep.subr.mxu0 0.0
    %393 = vmatpush1.msra.mxu0 0.0
    %394 = vmatprep.subr.mxu0 0.0
    %395 = vmatpush1.msra.mxu0 0.0
    %396 = vmatprep.subr.mxu0 0.0
    %397 = vmatpush1.msra.mxu0 0.0
    %398 = vmatprep.subr.mxu0 0.0
    %399 = vmatpush1.msra.mxu0 0.0
    %400 = vmatprep.subr.mxu0 0.0
    %401 = vmatpush1.msra.mxu0 0.0
    %402 = vmatprep.subr.mxu0 0.0
    %403 = vmatpush1.msra.mxu0 0.0
    %404 = vmatprep.subr.mxu0 0.0
    %405 = vmatpush1.msra.mxu0 0.0
    %406 = vmatprep.subr.mxu0 0.0
    %407 = vmatpush1.msra.mxu0 0.0
    %408 = vmatprep.mubr.f32.mxu0 0.0
    %409 = vmatmul.mubr.f32.gmra.mrb[0].mxu0 %v333
    %v410 = vpop.f32.mrb[0].mxu0
    %v411 = vadd.f32 0.0, %v410
    %v412 = vpop.f32.mrb[0].mxu0
    %v413 = vadd.f32 0.0, %v412
    %414 = vmatprep.mubr.f32.mxu0 0.0
    %415 = vmatmul.mubr.f32.gmra.mrb[0].mxu0 %v336
    %v416 = vpop.f32.mrb[0].mxu0
    %v417 = vadd.f32 0.0, %v416
    %v418 = vpop.f32.mrb[0].mxu0
    %v419 = vadd.f32 0.0, %v418
    %420 = vmatprep.mubr.f32.mxu0 0.0
    %421 = vmatmul.mubr.f32.gmra.mrb[0].mxu0 %v339
    %v422 = vpop.f32.mrb[0].mxu0
    %v423 = vadd.f32 0.0, %v422
    %v424 = vpop.f32.mrb[0].mxu0
    %v425 = vadd.f32 0.0, %v424
    %426 = vmatprep.mubr.f32.mxu0 0.0
    %427 = vmatmul.mubr.f32.gmra.mrb[0].mxu0 %v342
    %v428 = vpop.f32.mrb[0].mxu0
    %v429 = vadd.f32 0.0, %v428
    %v430 = vpop.f32.mrb[0].mxu0
    %v431 = vadd.f32 0.0, %v430
    %432 = vdwg.mxu0
    %433 = vmatprep.subr.mxu0 %v123
    %434 = vmatpush1.msra.mxu0 %v122
    %435 = vmatprep.subr.mxu0 %v127
    %436 = vmatpush1.msra.mxu0 %v126
    %437 = vmatprep.subr.mxu0 %v131
    %438 = vmatpush1.msra.mxu0 %v130
    %439 = vmatprep.subr.mxu0 0.0
    %440 = vmatpush1.msra.mxu0 0.0
    %441 = vmatprep.subr.mxu0 0.0
    %442 = vmatpush1.msra.mxu0 0.0
    %443 = vmatprep.subr.mxu0 0.0
    %444 = vmatpush1.msra.mxu0 0.0
    %445 = vmatprep.subr.mxu0 0.0
    %446 = vmatpush1.msra.mxu0 0.0
    %447 = vmatprep.subr.mxu0 0.0
    %448 = vmatpush1.msra.mxu0 0.0
    %449 = vmatprep.subr.mxu0 0.0
    %450 = vmatpush1.msra.mxu0 0.0
    %451 = vmatprep.subr.mxu0 0.0
    %452 = vmatpush1.msra.mxu0 0.0
    %453 = vmatprep.subr.mxu0 0.0
    %454 = vmatpush1.msra.mxu0 0.0
    %455 = vmatprep.subr.mxu0 0.0
    %456 = vmatpush1.msra.mxu0 0.0
    %457 = vmatprep.subr.mxu0 0.0
    %458 = vmatpush1.msra.mxu0 0.0
    %459 = vmatprep.subr.mxu0 0.0
    %460 = vmatpush1.msra.mxu0 0.0
    %461 = vmatprep.subr.mxu0 0.0
    %462 = vmatpush1.msra.mxu0 0.0
    %463 = vmatprep.subr.mxu0 0.0
    %464 = vmatpush1.msra.mxu0 0.0
    %465 = vmatprep.subr.mxu0 0.0
    %466 = vmatpush1.msra.mxu0 0.0
    %467 = vmatprep.subr.mxu0 0.0
    %468 = vmatpush1.msra.mxu0 0.0
    %469 = vmatprep.subr.mxu0 0.0
    %470 = vmatpush1.msra.mxu0 0.0
    %471 = vmatprep.subr.mxu0 0.0
    %472 = vmatpush1.msra.mxu0 0.0
    %473 = vmatprep.subr.mxu0 0.0
    %474 = vmatpush1.msra.mxu0 0.0
    %475 = vmatprep.subr.mxu0 0.0
    %476 = vmatpush1.msra.mxu0 0.0
    %477 = vmatprep.subr.mxu0 0.0
    %478 = vmatpush1.msra.mxu0 0.0
    %479 = vmatprep.subr.mxu0 0.0
    %480 = vmatpush1.msra.mxu0 0.0
    %481 = vmatprep.subr.mxu0 0.0
    %482 = vmatpush1.msra.mxu0 0.0
    %483 = vmatprep.subr.mxu0 0.0
    %484 = vmatpush1.msra.mxu0 0.0
    %485 = vmatprep.subr.mxu0 0.0
    %486 = vmatpush1.msra.mxu0 0.0
    %487 = vmatprep.subr.mxu0 0.0
    %488 = vmatpush1.msra.mxu0 0.0
    %489 = vmatprep.subr.mxu0 0.0
    %490 = vmatpush1.msra.mxu0 0.0
    %491 = vmatprep.subr.mxu0 0.0
    %492 = vmatpush1.msra.mxu0 0.0
    %493 = vmatprep.subr.mxu0 0.0
    %494 = vmatpush1.msra.mxu0 0.0
    %495 = vmatprep.subr.mxu0 0.0
    %496 = vmatpush1.msra.mxu0 0.0
    %497 = vmatprep.mubr.f32.mxu0 0.0
    %498 = vmatmul.mubr.f32.gmra.mrb[0].mxu0 %v333
    %v499 = vpop.f32.mrb[0].mxu0
    %v500 = vadd.f32 0.0, %v499
    %v501 = vpop.f32.mrb[0].mxu0
    %v502 = vadd.f32 0.0, %v501
    %503 = vmatprep.mubr.f32.mxu0 0.0
    %504 = vmatmul.mubr.f32.gmra.mrb[0].mxu0 %v336
    %v505 = vpop.f32.mrb[0].mxu0
    %v506 = vadd.f32 0.0, %v505
    %v507 = vpop.f32.mrb[0].mxu0
    %v508 = vadd.f32 0.0, %v507
    %509 = vmatprep.mubr.f32.mxu0 0.0
    %510 = vmatmul.mubr.f32.gmra.mrb[0].mxu0 %v339
    %v511 = vpop.f32.mrb[0].mxu0
    %v512 = vadd.f32 0.0, %v511
    %v513 = vpop.f32.mrb[0].mxu0
    %v514 = vadd.f32 0.0, %v513
    %515 = vmatprep.mubr.f32.mxu0 0.0
    %516 = vmatmul.mubr.f32.gmra.mrb[0].mxu0 %v342
    %v517 = vpop.f32.mrb[0].mxu0
    %v518 = vadd.f32 0.0, %v517
    %v519 = vpop.f32.mrb[0].mxu0
    %v520 = vadd.f32 0.0, %v519
    %521 = vdwg.mxu0
    %v522 = vld [vmem:[%s5] sm:$0xff]
    %v523 = vld [vmem:[%s5 + $0x8] sm:$0xff]
    %v524 = vld [vmem:[%s5 + $0x10] sm:$0xff]
    %v525 = vld [vmem:[%s5 + $0x18] sm:$0xff]
    %527 = vset.pattern.permute.xlu0 0
    %528 = vperm.xlu0 %527, %v522
    %v529 = vpop.permute.xlu0 %528
    %532 = vset.pattern.permute.xlu0 0
    %533 = vperm.xlu0 %532, %v523
    %v534 = vpop.permute.xlu0 %533
    %537 = vset.pattern.permute.xlu0 0
    %538 = vperm.xlu0 %537, %v524
    %v539 = vpop.permute.xlu0 %538
    %542 = vset.pattern.permute.xlu0 0
    %543 = vperm.xlu0 %542, %v525
    %v544 = vpop.permute.xlu0 %543
    %v546 = vmul.f32 %v216, %v529
    %v547 = vmul.f32 %v218, %v529
    %v548 = vmul.f32 %v305, %v529
    %v549 = vmul.f32 %v307, %v529
    %v550 = vmul.f32 %v222, %v534
    %v551 = vmul.f32 %v224, %v534
    %v552 = vmul.f32 %v311, %v534
    %v553 = vmul.f32 %v313, %v534
    %v554 = vmul.f32 %v228, %v539
    %v555 = vmul.f32 %v230, %v539
    %v556 = vmul.f32 %v317, %v539
    %v557 = vmul.f32 %v319, %v539
    %v558 = vmul.f32 %v234, %v544
    %v559 = vmul.f32 %v236, %v544
    %v560 = vmul.f32 %v323, %v544
    %v561 = vmul.f32 %v325, %v544
    %v562 = vadd.f32 %v546, %v550
    %v563 = vadd.f32 %v562, %v554
    %v564 = vadd.f32 %v563, %v558
    %v565 = vrot.slane %v564, 4
    %v566 = vadd.f32 %v564, %v565
    %v567 = vrot.slane %v566, 2
    %v568 = vadd.f32 %v566, %v567
    %v569 = vrot.slane %v568, 1
    %v570 = vadd.f32 %v568, %v569
    %v571 = vadd.f32 %v547, %v551
    %v572 = vadd.f32 %v571, %v555
    %v573 = vadd.f32 %v572, %v559
    %v574 = vrot.slane %v573, 4
    %v575 = vadd.f32 %v573, %v574
    %v576 = vrot.slane %v575, 2
    %v577 = vadd.f32 %v575, %v576
    %v578 = vrot.slane %v577, 1
    %v579 = vadd.f32 %v577, %v578
    %v580 = vadd.f32 %v548, %v552
    %v581 = vadd.f32 %v580, %v556
    %v582 = vadd.f32 %v581, %v560
    %v583 = vrot.slane %v582, 4
    %v584 = vadd.f32 %v582, %v583
    %v585 = vrot.slane %v584, 2
    %v586 = vadd.f32 %v584, %v585
    %v587 = vrot.slane %v586, 1
    %v588 = vadd.f32 %v586, %v587
    %v589 = vadd.f32 %v549, %v553
    %v590 = vadd.f32 %v589, %v557
    %v591 = vadd.f32 %v590, %v561
    %v592 = vrot.slane %v591, 4
    %v593 = vadd.f32 %v591, %v592
    %v594 = vrot.slane %v593, 2
    %v595 = vadd.f32 %v593, %v594
    %v596 = vrot.slane %v595, 1
    %v597 = vadd.f32 %v595, %v596
    %v598 = vld [vmem:[%s6] sm:$0xff]
    %v599 = vld [vmem:[%s6 + $0x8] sm:$0xff]
    %v600 = vld [vmem:[%s6 + $0x10] sm:$0xff]
    %v601 = vld [vmem:[%s6 + $0x18] sm:$0xff]
    %603 = vset.pattern.permute.xlu0 0
    %604 = vperm.xlu0 %603, %v598
    %v605 = vpop.permute.xlu0 %604
    %608 = vset.pattern.permute.xlu0 0
    %609 = vperm.xlu0 %608, %v599
    %v610 = vpop.permute.xlu0 %609
    %613 = vset.pattern.permute.xlu0 0
    %614 = vperm.xlu0 %613, %v600
    %v615 = vpop.permute.xlu0 %614
    %618 = vset.pattern.permute.xlu0 0
    %619 = vperm.xlu0 %618, %v601
    %v620 = vpop.permute.xlu0 %619
    %v622 = vmul.f32 %v411, %v605
    %v623 = vmul.f32 %v413, %v605
    %v624 = vmul.f32 %v500, %v605
    %v625 = vmul.f32 %v502, %v605
    %v626 = vmul.f32 %v417, %v610
    %v627 = vmul.f32 %v419, %v610
    %v628 = vmul.f32 %v506, %v610
    %v629 = vmul.f32 %v508, %v610
    %v630 = vmul.f32 %v423, %v615
    %v631 = vmul.f32 %v425, %v615
    %v632 = vmul.f32 %v512, %v615
    %v633 = vmul.f32 %v514, %v615
    %v634 = vmul.f32 %v429, %v620
    %v635 = vmul.f32 %v431, %v620
    %v636 = vmul.f32 %v518, %v620
    %v637 = vmul.f32 %v520, %v620
    %v638 = vadd.f32 %v622, %v626
    %v639 = vadd.f32 %v638, %v630
    %v640 = vadd.f32 %v639, %v634
    %v641 = vrot.slane %v640, 4
    %v642 = vadd.f32 %v640, %v641
    %v643 = vrot.slane %v642, 2
    %v644 = vadd.f32 %v642, %v643
    %v645 = vrot.slane %v644, 1
    %v646 = vadd.f32 %v644, %v645
    %v647 = vadd.f32 %v623, %v627
    %v648 = vadd.f32 %v647, %v631
    %v649 = vadd.f32 %v648, %v635
    %v650 = vrot.slane %v649, 4
    %v651 = vadd.f32 %v649, %v650
    %v652 = vrot.slane %v651, 2
    %v653 = vadd.f32 %v651, %v652
    %v654 = vrot.slane %v653, 1
    %v655 = vadd.f32 %v653, %v654
    %v656 = vadd.f32 %v624, %v628
    %v657 = vadd.f32 %v656, %v632
    %v658 = vadd.f32 %v657, %v636
    %v659 = vrot.slane %v658, 4
    %v660 = vadd.f32 %v658, %v659
    %v661 = vrot.slane %v660, 2
    %v662 = vadd.f32 %v660, %v661
    %v663 = vrot.slane %v662, 1
    %v664 = vadd.f32 %v662, %v663
    %v665 = vadd.f32 %v625, %v629
    %v666 = vadd.f32 %v665, %v633
    %v667 = vadd.f32 %v666, %v637
    %v668 = vrot.slane %v667, 4
    %v669 = vadd.f32 %v667, %v668
    %v670 = vrot.slane %v669, 2
    %v671 = vadd.f32 %v669, %v670
    %v672 = vrot.slane %v671, 1
    %v673 = vadd.f32 %v671, %v672
    %v674 = vadd.f32 %v570, %v646
    %v675 = vadd.f32 %v579, %v655
    %v676 = vadd.f32 %v588, %v664
    %v677 = vadd.f32 %v597, %v673
    %s678 = sld [smem:[#allocation2]]
    %v679 = vstv %s678
    %v680 = vadd.f32 %v674, %v679
    %v681 = vadd.f32 %v675, %v679
    %v682 = vadd.f32 %v676, %v679
    %v683 = vadd.f32 %v677, %v679
    %v688 = vcombine.low %v680, %v681
    %v689 = vcombine.low %v682, %v683
    %v691 = vunpack.c.l.s4 1966171168
    %v692 = vunpack.c.0.s8 %v691
    %v693 = vlaneseq
    %v694 = vshrl.u32 %v693, 7
    %v695 = vsub.s32 %v692, %v694
    %v696 = vrot.slane %v688, %v695
    %v698 = vunpack.c.l.s4 1966171168
    %v699 = vunpack.c.0.s8 %v698
    %v700 = vlaneseq
    %v701 = vshrl.u32 %v700, 7
    %v702 = vsub.s32 %v699, %v701
    %v703 = vrot.slane %v689, %v702
    %v704 = vcombine.low %v696, %v703
    %v706 = vunpack.c.l.s4 1966171168
    %v707 = vunpack.c.0.s8 %v706
    %v708 = vlaneseq
    %v709 = vshrl.u32 %v708, 7
    %v710 = vsub.s32 %v707, %v709
    %v711 = vrot.slane %v704, %v710
    %v713 = vlaneseq
    %vm714 = vcmp.ge.s32.totalorder %v713, 0
    %vm715 = vcmp.lt.s32.totalorder %v713, 512
    %vm716 = vmand %vm714, %vm715
    %717 = vst.msk [vmem:[#allocation3] sm:$0xf] %vm716, %v711
    %v718 = vlaneseq
    %v719 = vand.u32 %v718, 127
    %v720 = vadd.s32 %v719, 128
    %v721 = vadd.s32 %v719, 256
    %v722 = vadd.s32 %v719, 384
    %s723 = smul.u32 0, 512
    %v724 = vstv %s723
    %v725 = vadd.s32 %v724, %v719
    %v726 = vadd.s32 %v724, %v720
    %v727 = vadd.s32 %v724, %v721
    %v728 = vadd.s32 %v724, %v722
    %vm729 = vcmp.lt.s32.totalorder %v725, 8
    %vm730 = vcmp.lt.s32.totalorder %v726, 8
    %vm731 = vcmp.lt.s32.totalorder %v727, 8
    %vm732 = vcmp.lt.s32.totalorder %v728, 8
    %v733 = vld [vmem:[%s2] sm:$0xf]
    %v735 = vlaneseq
    %v736 = vshrl.u32 %v735, 7
    %v737 = vsub.s32 0, %v736
    %v738 = vrot.slane %v733, %v737
    %v739 = vlaneseq
    %v740 = vshrl.u32 %v739, 7
    %v741 = vsub.s32 1, %v740
    %v742 = vrot.slane %v733, %v741
    %v743 = vlaneseq
    %v744 = vshrl.u32 %v743, 7
    %v745 = vsub.s32 2, %v744
    %v746 = vrot.slane %v733, %v745
    %v747 = vlaneseq
    %v748 = vshrl.u32 %v747, 7
    %v749 = vsub.s32 3, %v748
    %v750 = vrot.slane %v733, %v749
    %v755 = vsub.f32 %v680, %v738
    %v756 = vsub.f32 %v681, %v742
    %v757 = vsub.f32 %v682, %v746
    %v758 = vsub.f32 %v683, %v750
    %v759 = vsel %vm729, %v755, 0.0
    %v760 = vsel %vm730, %v756, 0.0
    %v761 = vsel %vm731, %v757, 0.0
    %v762 = vsel %vm732, %v758, 0.0
    %v763 = vmul.f32 %v759, %v759
    %v764 = vmul.f32 %v760, %v760
    %v765 = vmul.f32 %v761, %v761
    %v766 = vmul.f32 %v762, %v762
    %v771 = vcombine.low %v763, %v764
    %v772 = vcombine.low %v765, %v766
    %v774 = vunpack.c.l.s4 1966171168
    %v775 = vunpack.c.0.s8 %v774
    %v776 = vlaneseq
    %v777 = vshrl.u32 %v776, 7
    %v778 = vsub.s32 %v775, %v777
    %v779 = vrot.slane %v771, %v778
    %v781 = vunpack.c.l.s4 1966171168
    %v782 = vunpack.c.0.s8 %v781
    %v783 = vlaneseq
    %v784 = vshrl.u32 %v783, 7
    %v785 = vsub.s32 %v782, %v784
    %v786 = vrot.slane %v772, %v785
    %v787 = vcombine.low %v779, %v786
    %v789 = vunpack.c.l.s4 1966171168
    %v790 = vunpack.c.0.s8 %v789
    %v791 = vlaneseq
    %v792 = vshrl.u32 %v791, 7
    %v793 = vsub.s32 %v790, %v792
    %v794 = vrot.slane %v787, %v793
    %796 = vst.msk [vmem:[#allocation5] sm:$0xf] %vm716, %v794
    // Predicated region
    $region34: #{tpu_custom_call.1} parent=1 // pred_check
      _
    $region35: #{tpu_custom_call.1} parent=1 // pred_check_branch
      %798 = sbr.rel (0) target = $region37
    $region36: #{tpu_custom_call.1} parent=1 // pred_region
      %s800 = ssub.s32 64, 64
      %801 = vsyncadd [#allocation4], %s800
      %s803 = sshll.u32 [#allocation3], 4
      %s804 = int_to_ptr.vmem [resolvable:$true] %s803
      %806 = dma.vmem_to_hbm [thread:$0]  %s804, 64, %s8, [#allocation4]
    $region37: #{tpu_custom_call.1} parent=1 // pred_fallthru
      _
    // Predicated region
    $region38: #{tpu_custom_call.1} parent=1 // pred_check
      _
    $region39: #{tpu_custom_call.1} parent=1 // pred_check_branch
      %808 = sbr.rel (0) target = $region41
    $region40: #{tpu_custom_call.1} parent=1 // pred_region
      %s810 = ssub.s32 64, 64
      %811 = vsyncadd [#allocation6], %s810
      %s813 = sshll.u32 [#allocation5], 4
      %s814 = int_to_ptr.vmem [resolvable:$true] %s813
      %816 = dma.vmem_to_hbm [thread:$0]  %s814, 64, %s9, [#allocation6]
    $region41: #{tpu_custom_call.1} parent=1 // pred_fallthru
      _
    // Predicated region
    $region42: #{tpu_custom_call.1} parent=1 // pred_check
      _
    $region43: #{tpu_custom_call.1} parent=1 // pred_check_branch
      %818 = sbr.rel (0) target = $region45
    $region44: #{tpu_custom_call.1} parent=1 // pred_region
      %819 = dma.done [#allocation4], 64
    $region45: #{tpu_custom_call.1} parent=1 // pred_fallthru
      _
    // Predicated region
    $region46: #{tpu_custom_call.1} parent=1 // pred_check
      _
    $region47: #{tpu_custom_call.1} parent=1 // pred_check_branch
      %821 = sbr.rel (0) target = $region49
    $region48: #{tpu_custom_call.1} parent=1 // pred_region
      %822 = dma.done [#allocation6], 64
    $region49: #{tpu_custom_call.1} parent=1 // pred_fallthru
      _
    %823 = vsyncpa [#allocation4], 1
    %824 = vsyncpa [#allocation6], 1

</llo_original>
